<compile_context>
chip_gen: v7x
topology: tpu7x:2x2x1
jax: 0.10.0
libtpu: 0.0.40
codegen_flags: <defaults>
</compile_context>

<pallas_src>
import jax
import jax.numpy as jnp
import numpy as np
from jax.experimental import pallas as pl
from jax.experimental.pallas import tpu as pltpu

WINDOWS = (2, 3, 4, 5)


def _round_up(x, m):
    return ((x + m - 1) // m) * m


def _vmem_capacity_bytes():
    """Generation-aware VMEM capacity (v7x: 64 MiB, v5e/v6e: 128 MiB)."""
    try:
        cap = getattr(pltpu.get_tpu_info(), "vmem_capacity_bytes", None)
        if cap:
            return int(cap)
    except Exception:
        pass
    return 64 << 20          # conservative fallback == v7x physical VMEM


def _pick_block_b(batch, seq, kp, np_cols, cp):
    """Batch tile sized against a generation-aware VMEM budget."""
    budget = _vmem_capacity_bytes() // 4   # headroom for weights, double-buffers, scratch
    # Live bytes per batch row: double-buffered bf16 x block + ~3 f32 (S, NP)
    # intermediates (conv / relu / masked) + pooled row + double-buffered f32 out row.
    per_row = 2 * seq * kp * 2 + 3 * seq * np_cols * 4 + np_cols * 4 + 2 * cp * 4
    tb = budget // max(per_row, 1)
    if batch > 32:
        # Keep >= 4 grid steps so the two v7x TensorCores each get >= 2 pipelined steps.
        tb = min(tb, _round_up(pl.cdiv(batch, 4), 8))
    tb = max(8, (tb // 8) * 8)             # output block sublane alignment
    return min(tb, _round_up(batch, 8))


def _korchar_kernel(x_ref, w_ref, fc_ref, mask_ref, out_ref):
    """One batch tile: im2col conv (single matmul) + ReLU + masked max-pool + fc."""
    TB, S, KP = x_ref.shape
    NP = w_ref.shape[1]

    # Collapse (TB, S) into the MXU M dim (leading-dim reshape: layout no-op).
    x2 = x_ref[...].reshape(TB * S, KP)                                   # bf16 (T, KP)
    conv = jnp.dot(x2, w_ref[...], preferred_element_type=jnp.float32)    # f32 (T, NP)

    # ReLU, then multiplicative valid-length mask (ReLU >= 0, so 0-masking keeps the
    # time max identical to max over valid positions only).
    z = jnp.maximum(conv, 0.0).reshape(TB, S, NP)
    pooled = jnp.max(z * mask_ref[...], axis=1)                           # f32 (TB, NP)

    # Classifier: the pooled slab already IS the concatenated (lane-padded) feature
    # vector; bf16 operands with f32 accumulation.
    out_ref[...] = jnp.dot(pooled.astype(jnp.bfloat16), fc_ref[...],
                           preferred_element_type=jnp.float32)


def korchar_cnn_forward(x_nchw, conv_weights, fc_weight, windows=WINDOWS, *,
                        block_b=None):
    """Forward pass.

    x_nchw:        (B, 1, S, E) float32 — PyTorch NCHW conv input.
    conv_weights:  list of PyTorch Conv2d weights, conv_weights[k] shape (F, 1, n_k, E).
    fc_weight:     PyTorch Linear weight, shape (C, len(windows) * F).
    Returns logits of shape (B, C).
    """
    B, c_in, S, E = x_nchw.shape
    assert c_in == 1, "KorCharCNN uses a single input channel"
    F_ = conv_weights[0].shape[0]
    C = fc_weight.shape[0]
    G = len(windows)
    max_w = max(windows)
    KE = max_w * E
    KP = _round_up(KE, 128)            # folded contraction dim (e.g. 160 -> 256)
    NP = _round_up(G * F_, 128)        # lane-dense fused filter axis
    CP = _round_up(C, 128)             # lane-dense output store

    # ---- host-side glue (XLA): im2col + layout packing + bf16 cast ----------
    x = x_nchw[:, 0].astype(jnp.bfloat16)                                  # (B, S, E)
    taps = [jnp.pad(x[:, i:, :], ((0, 0), (0, i), (0, 0))) for i in range(max_w)]
    x_tap = jnp.concatenate(taps, axis=-1)                                 # (B, S, max_w*E)

    # Fused conv weight: W[i*E + e, g*F + f] = conv_weights[g][f, 0, i, e].
    w_fused = jnp.zeros((KP, NP), jnp.bfloat16)
    for g, (n, w) in enumerate(zip(windows, conv_weights)):
        w3 = jnp.transpose(w[:, 0], (1, 2, 0)).astype(jnp.bfloat16)        # (n, E, F)
        w_fused = w_fused.at[:n * E, g * F_:(g + 1) * F_].set(w3.reshape(n * E, F_))

    # fc weight (C, G*F) -> bf16 padded (NP, CP); padded rows/cols are zero.
    fc_p = jnp.zeros((NP, CP), jnp.bfloat16)
    fc_p = fc_p.at[:G * F_, :C].set(fc_weight.T.astype(jnp.bfloat16))

    # Multiplicative valid-time mask: window n is valid for t in [0, S - n].
    mask_np = np.zeros((1, S, NP), np.float32)
    for g, n in enumerate(windows):
        mask_np[0, :S - n + 1, g * F_:(g + 1) * F_] = 1.0
    mask = jnp.asarray(mask_np)

    # ---- batch tiling / padding ---------------------------------------------
    TB = block_b if block_b is not None else _pick_block_b(B, S, KP, NP, CP)
    TB = max(8, (min(TB, _round_up(B, 8)) // 8) * 8)
    BP = _round_up(B, TB)
    nb = BP // TB
    # Zero batch padding (not unspecified Pallas block padding): safe with the
    # multiplicative mask, padded rows produce exact zeros and are sliced off.
    x_tap = jnp.pad(x_tap, ((0, BP - B), (0, 0), (0, KP - KE)))

    flops = 2 * BP * S * KP * NP + 2 * BP * NP * CP
    bytes_accessed = (x_tap.size * 2 + w_fused.size * 2 + fc_p.size * 2
                      + mask.size * 4 + BP * CP * 4)
    vmem_limit = min(96 << 20, _vmem_capacity_bytes() // 2)   # v7x: 32 MiB, v5e/v6e: 64 MiB

    # TODO(synk): for very long sequences, add an "arbitrary" S grid axis with a
    # running-max VMEM scratch instead of shrinking TB.
    out_padded = pl.pallas_call(
        _korchar_kernel,
        out_shape=jax.ShapeDtypeStruct((BP, CP), jnp.float32),
        grid=(nb,),
        in_specs=[
            pl.BlockSpec((TB, S, KP), lambda b: (b, 0, 0)),     # im2col x: batch-tiled
            pl.BlockSpec((KP, NP), lambda b: (0, 0)),           # fused conv weight
            pl.BlockSpec((NP, CP), lambda b: (0, 0)),           # fc weight
            pl.BlockSpec((1, S, NP), lambda b: (0, 0, 0)),      # valid-time mask
        ],
        out_specs=pl.BlockSpec((TB, CP), lambda b: (b, 0)),
        compiler_params=pltpu.CompilerParams(
            dimension_semantics=("parallel",),
            vmem_limit_bytes=vmem_limit),
        cost_estimate=pl.CostEstimate(flops=flops, transcendentals=0,
                                      bytes_accessed=bytes_accessed),
    )(x_tap, w_fused, fc_p, mask)

    return out_padded[:B, :C]


def reference_forward(x_nchw, conv_weights, fc_weight, windows=WINDOWS):
    """Pure-JAX float32 reference with the PyTorch module's math."""
    x = x_nchw[:, 0].astype(jnp.float32)                                   # (B, S, E)
    B, S, E = x.shape
    pooled = []
    for n, w in zip(windows, conv_weights):
        w3 = jnp.transpose(w[:, 0], (1, 2, 0))                             # (n, E, F)
        L = S - n + 1
        acc = jnp.zeros((B, L, w3.shape[-1]), jnp.float32)
        for i in range(n):
            acc = acc + jnp.einsum('ble,ef->blf', x[:, i:i + L, :], w3[i])
        pooled.append(jnp.max(jnp.maximum(acc, 0.0), axis=1))              # (B, F)
    p = jnp.concatenate(pooled, axis=1)                                    # (B, G*F)
    return p @ fc_weight.T                                                 # (B, C)


if __name__ == "__main__":
    # Small shapes consistent with the module: batch=16, seq=16, embedding_dim=32,
    # num_filters=16, windows=(2,3,4,5), num_classes=2.  block_b=8 -> 2-step grid.
    B, S, E = 16, 16, 32
    num_filters, num_classes = 16, 2

    key = jax.random.PRNGKey(0)
    keys = jax.random.split(key, 2 + len(WINDOWS))

    x = jax.random.normal(keys[0], (B, 1, S, E), dtype=jnp.float32)
    # PyTorch Conv2d weights (F, 1, n, E), no bias.
    conv_weights = [
        0.1 * jax.random.normal(k, (num_filters, 1, n, E), dtype=jnp.float32)
        for n, k in zip(WINDOWS, keys[1:1 + len(WINDOWS)])
    ]
    # PyTorch Linear weight (C, G*F), no bias.
    fc_weight = 0.1 * jax.random.normal(
        keys[-1], (num_classes, len(WINDOWS) * num_filters), dtype=jnp.float32)

    out = korchar_cnn_forward(x, conv_weights, fc_weight, block_b=8)
    out = jax.block_until_ready(out)

    ref = reference_forward(x, conv_weights, fc_weight)
    # bf16 activations / conv weights / fc with f32 accumulation -> loose tolerance.
    np.testing.assert_allclose(np.asarray(out), np.asarray(ref), rtol=2e-2, atol=2e-2)
    print("KERNEL_OK")
</pallas_src>

<mosaic_0001>
module attributes {stable_mosaic.version = 11 : i64} {
  func.func @_korchar_kernel(%arg0: i32, %arg1: memref<8x16x256xbf16, #tpu.memory_space<vmem>>, %arg2: memref<256x128xbf16, #tpu.memory_space<vmem>>, %arg3: memref<128x128xbf16, #tpu.memory_space<vmem>>, %arg4: memref<1x16x128xf32, #tpu.memory_space<vmem>>, %arg5: memref<8x128xf32, #tpu.memory_space<vmem>>) attributes {dimension_semantics = [#tpu.dimension_semantics<parallel>], iteration_bounds = array<i64: 2>, scalar_prefetch = 0 : i64, scratch_operands = 0 : i64, tpu.core_type = #tpu.core_type<tc>, window_params = [{transform_indices = @transform_0, window_bounds = array<i64: 8, 16, 256>}, {pipeline_mode = #tpu.pipeline_mode<synchronous>, transform_indices = @transform_1, window_bounds = array<i64: 256, 128>}, {pipeline_mode = #tpu.pipeline_mode<synchronous>, transform_indices = @transform_2, window_bounds = array<i64: 128, 128>}, {pipeline_mode = #tpu.pipeline_mode<synchronous>, transform_indices = @transform_3, window_bounds = array<i64: 1, 16, 128>}, {transform_indices = @transform_4, window_bounds = array<i64: 8, 128>}]} {
    %c0 = arith.constant 0 : index
    %c0_0 = arith.constant 0 : index
    %c0_1 = arith.constant 0 : index
    %0 = vector.load %arg1[%c0, %c0_0, %c0_1] : memref<8x16x256xbf16, #tpu.memory_space<vmem>>, vector<8x16x256xbf16>
    %1 = vector.shape_cast %0 : vector<8x16x256xbf16> to vector<128x256xbf16>
    %c0_2 = arith.constant 0 : index
    %c0_3 = arith.constant 0 : index
    %2 = vector.load %arg2[%c0_2, %c0_3] : memref<256x128xbf16, #tpu.memory_space<vmem>>, vector<256x128xbf16>
    %cst = arith.constant dense<0.000000e+00> : vector<128x128xf32>
    %3 = tpu.matmul %1, %2, %cst {dimension_numbers = #tpu.dot_dimension_numbers<[1], [0], [0], [1], [0, 0, 1, 1], [], []>} : vector<128x256xbf16>, vector<256x128xbf16>, vector<128x128xf32> -> vector<128x128xf32>
    %cst_4 = arith.constant 0.000000e+00 : f32
    %4 = vector.broadcast %cst_4 : f32 to vector<128x128xf32>
    %5 = arith.maximumf %3, %4 : vector<128x128xf32>
    %6 = vector.shape_cast %5 : vector<128x128xf32> to vector<8x16x128xf32>
    %c0_5 = arith.constant 0 : index
    %c0_6 = arith.constant 0 : index
    %c0_7 = arith.constant 0 : index
    %7 = vector.load %arg4[%c0_5, %c0_6, %c0_7] : memref<1x16x128xf32, #tpu.memory_space<vmem>>, vector<1x16x128xf32>
    %8 = vector.broadcast %7 : vector<1x16x128xf32> to vector<8x16x128xf32>
    %9 = arith.mulf %6, %8 : vector<8x16x128xf32>
    %cst_8 = arith.constant dense<0xFF800000> : vector<8x128xf32>
    %10 = vector.multi_reduction <maximumf>, %9, %cst_8 [1] : vector<8x16x128xf32> to vector<8x128xf32>
    %11 = arith.truncf %10 : vector<8x128xf32> to vector<8x128xbf16>
    %c0_9 = arith.constant 0 : index
    %c0_10 = arith.constant 0 : index
    %12 = vector.load %arg3[%c0_9, %c0_10] : memref<128x128xbf16, #tpu.memory_space<vmem>>, vector<128x128xbf16>
    %cst_11 = arith.constant dense<0.000000e+00> : vector<8x128xf32>
    %13 = tpu.matmul %11, %12, %cst_11 {dimension_numbers = #tpu.dot_dimension_numbers<[1], [0], [0], [1], [0, 0, 1, 1], [], []>} : vector<8x128xbf16>, vector<128x128xbf16>, vector<8x128xf32> -> vector<8x128xf32>
    %c0_12 = arith.constant 0 : index
    %c0_13 = arith.constant 0 : index
    %14 = vector.load %arg5[%c0_12, %c0_13] : memref<8x128xf32, #tpu.memory_space<vmem>>, vector<8x128xf32>
    tpu.vector_store %arg5[%c0_12, %c0_13], %13 {strides = array<i32>} : memref<8x128xf32, #tpu.memory_space<vmem>>, vector<8x128xf32>,
    return
  }
  func.func @transform_0(%arg0: i32) -> (i32, i32, i32) {
    %c0_i32 = arith.constant 0 : i32
    %c0_i32_0 = arith.constant 0 : i32
    %c0_i32_1 = arith.constant 0 : i32
    return %arg0, %c0_i32, %c0_i32_0 : i32, i32, i32
  }
  func.func @transform_1(%arg0: i32) -> (i32, i32) {
    %c0_i32 = arith.constant 0 : i32
    %c0_i32_0 = arith.constant 0 : i32
    %c0_i32_1 = arith.constant 0 : i32
    return %c0_i32, %c0_i32_0 : i32, i32
  }
  func.func @transform_2(%arg0: i32) -> (i32, i32) {
    %c0_i32 = arith.constant 0 : i32
    %c0_i32_0 = arith.constant 0 : i32
    %c0_i32_1 = arith.constant 0 : i32
    return %c0_i32, %c0_i32_0 : i32, i32
  }
  func.func @transform_3(%arg0: i32) -> (i32, i32, i32) {
    %c0_i32 = arith.constant 0 : i32
    %c0_i32_0 = arith.constant 0 : i32
    %c0_i32_1 = arith.constant 0 : i32
    %c0_i32_2 = arith.constant 0 : i32
    return %c0_i32, %c0_i32_0, %c0_i32_1 : i32, i32, i32
  }
  func.func @transform_4(%arg0: i32) -> (i32, i32) {
    %c0_i32 = arith.constant 0 : i32
    %c0_i32_0 = arith.constant 0 : i32
    return %arg0, %c0_i32 : i32, i32
  }
}

</mosaic_0001>

<llo_original>
// kernel: tpu_custom_call.1
$region0: #{tpu_custom_call.1}
  #allocation0 [shape = 'u32[]', space=smem, size = 0x4, offset = 0x4, fixed_abs, tag = 'smem constant byte address 0x4 - core index']
  #allocation1 [shape = 'u32[144,128]{1,0:T(1,128)}', space=vmem, size = 0x12000, scoped, tag = 'internal scratch']
  %s0 = inlined_call_operand.hbm [shape: bf16[16,16,256], index: 0, kind: input, shape index: {}]
  %s1 = inlined_call_operand.hbm [shape: bf16[256,128], index: 1, kind: input, shape index: {}]
  %s2 = inlined_call_operand.hbm [shape: bf16[128,128], index: 2, kind: input, shape index: {}]
  %s3 = inlined_call_operand.hbm [shape: f32[1,16,128], index: 3, kind: input, shape index: {}]
  %s4 = inlined_call_operand.hbm [shape: f32[16,128], index: 4, kind: output, shape index: {}]
  %s5 = sld [smem:[#allocation0]]
  $region65: #{tpu_custom_call.1} parent=0
    _
  %s7 = ssub.s32 1, %s5
  %s8 = scalar_select 0, %s7, %s5
  $region1: #{tpu_custom_call.1} parent=0
    #allocation2 [shape = 'u8[131072]{0}', space=vmem, size = 0x20000, scoped, tag = 'input window, operand 0']
    #allocation3 [shape = 's32[2]{0}', space=sflag, size = 0x8, scoped, tag = 'scoped memory for tpu_custom_call.1']
    #allocation4 [shape = 's32[2]{0}', space=sflag, size = 0x8, scoped, tag = 'scoped memory for tpu_custom_call.1']
    #allocation5 [shape = 'u8[65536]{0}', space=vmem, size = 0x10000, scoped, tag = 'input window, operand 1, single buffered']
    #allocation6 [shape = 's32[1]{0}', space=sflag, size = 0x4, scoped, tag = 'scoped memory for tpu_custom_call.1']
    #allocation7 [shape = 'u8[32768]{0}', space=vmem, size = 0x8000, scoped, tag = 'input window, operand 2, single buffered']
    #allocation8 [shape = 'u8[8192]{0}', space=vmem, size = 0x2000, scoped, tag = 'input window, operand 3, single buffered']
    #allocation9 [shape = 's32[1]{0}', space=sflag, size = 0x4, scoped, tag = 'scoped memory for tpu_custom_call.1']
    #allocation10 [shape = 'u8[8192]{0}', space=vmem, size = 0x2000, scoped, tag = 'output window, operand 0']
    %9 = vsyncpa [#allocation3], 0
    %s10 = scalar_lea.sflag [#allocation3], 1
    %11 = vsyncpa %s10, 0
    %12 = vsyncpa [#allocation6], 0
    %13 = vsyncpa [#allocation9], 0
    %14 = vsyncpa [#allocation4], 0
    %s15 = scalar_lea.sflag [#allocation4], 1
    %16 = vsyncpa %s15, 0
    loop: start=0, step=1, limit=4
    $region2: #{tpu_custom_call.1} parent=1 // loop_pre_header
      _
    $region3: #{tpu_custom_call.1} parent=1 // loop_header
      %s18 = sphi 0, %s22
      %p19 = scmp.ge.s32.totalorder %s18, 4
      %s28 = sphi 0, %s30
      %s31 = sphi 0, %s28
      %s32 = sphi 0, %s31
      %s48 = sphi 0, %s32
      %s52 = sphi 0, %s52
      %s54 = sphi 0, %s52
      %s55 = sphi 0, %s54
      %s69 = sphi 0, %s55
      %s73 = sphi 0, %s73
      %s75 = sphi 0, %s73
      %s76 = sphi 0, %s75
      %s90 = sphi 0, %s76
      %s94 = sphi 0, %s94
      %s96 = sphi 0, %s94
      %s97 = sphi 0, %s96
      %s111 = sphi 0, %s97
      %s117 = sphi 0, %s119
      %s120 = sphi 0, %s117
      %s121 = sphi 0, %s120
      %s137 = sphi 0, %s121
    $region4: #{tpu_custom_call.1} parent=1 // loop_header_branch
      %21 = sbr.rel (%p19) target = $region8
    $region5: #{tpu_custom_call.1} parent=1 // loop_body
      %s23 = ssub.s32 %s18, 1
      %s24 = ssub.s32 %s18, 2
      %s25 = sadd.s32 %s18, 1
      %s26 = ssub.s32 %s18, %s25
      %p27 = scmp.eq.s32.totalorder %s26, 0
      %s29 = sadd.s32 %s28, 1
      %s30 = scalar_select %p27, %s28, %s29
      %p33 = pneg %p27
      %p34 = scmp.eq.s32.totalorder %s18, 1
      %p35 = por %p33, %p34
      %p36 = scmp.ne.s32.totalorder %s28, %s31
      %p37 = scmp.eq.s32.totalorder %s18, 0
      %p38 = por %p36, %p37
      %p39 = scmp.ne.s32.totalorder %s28, %s31
      %p40 = scmp.eq.s32.totalorder %s23, 1
      %p41 = por %p39, %p40
      %p42 = scmp.ne.s32.totalorder %s31, %s32
      %p43 = scmp.eq.s32.totalorder %s23, 0
      %p44 = por %p42, %p43
      %p45 = scmp.ne.s32.totalorder %s31, %s32
      %p46 = scmp.eq.s32.totalorder %s24, 1
      %p47 = por %p45, %p46
      %p49 = scmp.ne.s32.totalorder %s32, %s48
      %p50 = scmp.eq.s32.totalorder %s24, 0
      %p51 = por %p49, %p50
      %s53 = sadd.s32 %s52, 1
      %p56 = scmp.eq.s32.totalorder %s18, 1
      %p57 = scmp.ne.s32.totalorder %s52, %s54
      %p58 = scmp.eq.s32.totalorder %s18, 0
      %p59 = por %p57, %p58
      %p60 = scmp.ne.s32.totalorder %s52, %s54
      %p61 = scmp.eq.s32.totalorder %s23, 1
      %p62 = por %p60, %p61
      %p63 = scmp.ne.s32.totalorder %s54, %s55
      %p64 = scmp.eq.s32.totalorder %s23, 0
      %p65 = por %p63, %p64
      %p66 = scmp.ne.s32.totalorder %s54, %s55
      %p67 = scmp.eq.s32.totalorder %s24, 1
      %p68 = por %p66, %p67
      %p70 = scmp.ne.s32.totalorder %s55, %s69
      %p71 = scmp.eq.s32.totalorder %s24, 0
      %p72 = por %p70, %p71
      %s74 = sadd.s32 %s73, 1
      %p77 = scmp.eq.s32.totalorder %s18, 1
      %p78 = scmp.ne.s32.totalorder %s73, %s75
      %p79 = scmp.eq.s32.totalorder %s18, 0
      %p80 = por %p78, %p79
      %p81 = scmp.ne.s32.totalorder %s73, %s75
      %p82 = scmp.eq.s32.totalorder %s23, 1
      %p83 = por %p81, %p82
      %p84 = scmp.ne.s32.totalorder %s75, %s76
      %p85 = scmp.eq.s32.totalorder %s23, 0
      %p86 = por %p84, %p85
      %p87 = scmp.ne.s32.totalorder %s75, %s76
      %p88 = scmp.eq.s32.totalorder %s24, 1
      %p89 = por %p87, %p88
      %p91 = scmp.ne.s32.totalorder %s76, %s90
      %p92 = scmp.eq.s32.totalorder %s24, 0
      %p93 = por %p91, %p92
      %s95 = sadd.s32 %s94, 1
      %p98 = scmp.eq.s32.totalorder %s18, 1
      %p99 = scmp.ne.s32.totalorder %s94, %s96
      %p100 = scmp.eq.s32.totalorder %s18, 0
      %p101 = por %p99, %p100
      %p102 = scmp.ne.s32.totalorder %s94, %s96
      %p103 = scmp.eq.s32.totalorder %s23, 1
      %p104 = por %p102, %p103
      %p105 = scmp.ne.s32.totalorder %s96, %s97
      %p106 = scmp.eq.s32.totalorder %s23, 0
      %p107 = por %p105, %p106
      %p108 = scmp.ne.s32.totalorder %s96, %s97
      %p109 = scmp.eq.s32.totalorder %s24, 1
      %p110 = por %p108, %p109
      %p112 = scmp.ne.s32.totalorder %s97, %s111
      %p113 = scmp.eq.s32.totalorder %s24, 0
      %p114 = por %p112, %p113
      %s115 = ssub.s32 %s18, %s25
      %p116 = scmp.eq.s32.totalorder %s115, 0
      %s118 = sadd.s32 %s117, 1
      %s119 = scalar_select %p116, %s117, %s118
      %p122 = pneg %p116
      %p123 = scmp.eq.s32.totalorder %s18, 1
      %p124 = por %p122, %p123
      %p125 = scmp.ne.s32.totalorder %s117, %s120
      %p126 = scmp.eq.s32.totalorder %s18, 0
      %p127 = por %p125, %p126
      %p128 = scmp.ne.s32.totalorder %s117, %s120
      %p129 = scmp.eq.s32.totalorder %s23, 1
      %p130 = por %p128, %p129
      %p131 = scmp.ne.s32.totalorder %s120, %s121
      %p132 = scmp.eq.s32.totalorder %s23, 0
      %p133 = por %p131, %p132
      %p134 = scmp.ne.s32.totalorder %s120, %s121
      %p135 = scmp.eq.s32.totalorder %s24, 1
      %p136 = por %p134, %p135
      %p138 = scmp.ne.s32.totalorder %s121, %s137
      %p139 = scmp.eq.s32.totalorder %s24, 0
      %p140 = por %p138, %p139
      %p141 = scmp.le.s32.totalorder 1, %s18
      %p142 = scmp.lt.s32.totalorder %s18, 3
      %p143 = pnand %p141, %p142
      %p144 = pneg %p143
      // Predicated region
      $region9: #{tpu_custom_call.1} parent=5 // pred_check
        _
      $region10: #{tpu_custom_call.1} parent=5 // pred_check_branch
        %146 = sbr.rel (%p143) target = $region12
      $region11: #{tpu_custom_call.1} parent=5 // pred_region
        %s147 = ssub.s32 %s18, 1
        // Predicated region
        $region13: #{tpu_custom_call.1} parent=11 // pred_check
          %p148 = pneg %p65
        $region14: #{tpu_custom_call.1} parent=11 // pred_check_branch
          %150 = sbr.rel (%p148) target = $region16
        $region15: #{tpu_custom_call.1} parent=11 // pred_region
          %s152 = ssub.s32 2048, 2048
          %153 = vsyncadd [#allocation6], %s152
          %s154 = sshll.u32 [#allocation5], 4
          %s155 = int_to_ptr.vmem [resolvable:$true] %s154
          %160 = dma.hbm_to_vmem [thread:$0]  %s1, 2048, %s155, [#allocation6], 64, 64, 4
        $region16: #{tpu_custom_call.1} parent=11 // pred_fallthru
          _
        // Predicated region
        $region17: #{tpu_custom_call.1} parent=11 // pred_check
          %p161 = pneg %p86
        $region18: #{tpu_custom_call.1} parent=11 // pred_check_branch
          %163 = sbr.rel (%p161) target = $region20
        $region19: #{tpu_custom_call.1} parent=11 // pred_region
          %s165 = ssub.s32 1024, 1024
          %166 = vsyncadd [#allocation6], %s165
          %s167 = sshll.u32 [#allocation7], 4
          %s168 = int_to_ptr.vmem [resolvable:$true] %s167
          %173 = dma.hbm_to_vmem [thread:$0]  %s2, 1024, %s168, [#allocation6], 64, 64, 4
        $region20: #{tpu_custom_call.1} parent=11 // pred_fallthru
          _
        // Predicated region
        $region21: #{tpu_custom_call.1} parent=11 // pred_check
          %p174 = pneg %p107
        $region22: #{tpu_custom_call.1} parent=11 // pred_check_branch
          %176 = sbr.rel (%p174) target = $region24
        $region23: #{tpu_custom_call.1} parent=11 // pred_region
          %s178 = ssub.s32 256, 256
          %179 = vsyncadd [#allocation9], %s178
          %s180 = sshll.u32 [#allocation8], 4
          %s181 = int_to_ptr.vmem [resolvable:$true] %s180
          %186 = dma.hbm_to_vmem [thread:$0]  %s3, 256, %s181, [#allocation9], 128, 128, 8
        $region24: #{tpu_custom_call.1} parent=11 // pred_fallthru
          _
      $region12: #{tpu_custom_call.1} parent=5 // pred_fallthru
        _
      %p187 = scmp.lt.s32.totalorder %s18, 2
      // Predicated region
      $region25: #{tpu_custom_call.1} parent=5 // pred_check
        %p188 = pneg %p187
      $region26: #{tpu_custom_call.1} parent=5 // pred_check_branch
        %190 = sbr.rel (%p188) target = $region28
      $region27: #{tpu_custom_call.1} parent=5 // pred_region
        // Predicated region
        $region29: #{tpu_custom_call.1} parent=27 // pred_check
          %p191 = pneg %p38
        $region30: #{tpu_custom_call.1} parent=27 // pred_check_branch
          %193 = sbr.rel (%p191) target = $region32
        $region31: #{tpu_custom_call.1} parent=27 // pred_region
          %s194 = sand.u32 %s28, 1
          %s195 = scalar_lea.sflag [#allocation3], %s194
          %s196 = sand.u32 %s28, 1
          %s197 = smul.addr %s196, 128
          %s198 = scalar_lea.vmem [#allocation2], %s197
          %s199 = smul.u32 8, %s18
          %s201 = ssub.s32 2048, 2048
          %202 = vsyncadd %s195, %s201
          %s203 = smul.addr %s199, 4
          %s204 = smul.addr %s203, 64
          %s205 = scalar_lea.hbm %s0, %s204
          %s206 = sshll.u32 %s198, 4
          %s207 = int_to_ptr.vmem [resolvable:$true] %s206
          %212 = dma.hbm_to_vmem [thread:$0]  %s205, 2048, %s207, %s195, 128, 128, 8
        $region32: #{tpu_custom_call.1} parent=27 // pred_fallthru
          _
      $region28: #{tpu_custom_call.1} parent=5 // pred_fallthru
        _
      %p213 = scmp.le.s32.totalorder 1, %s18
      %p214 = scmp.lt.s32.totalorder %s18, 3
      %p215 = pnand %p213, %p214
      %p216 = pneg %p215
      // Predicated region
      $region33: #{tpu_custom_call.1} parent=5 // pred_check
        _
      $region34: #{tpu_custom_call.1} parent=5 // pred_check_branch
        %218 = sbr.rel (%p215) target = $region36
      $region35: #{tpu_custom_call.1} parent=5 // pred_region
        %s219 = ssub.s32 %s18, 1
        %s220 = sand.u32 %s31, 1
        %s221 = scalar_lea.sflag [#allocation3], %s220
        %s222 = sand.u32 %s31, 1
        %s223 = smul.addr %s222, 128
        %s224 = scalar_lea.vmem [#allocation2], %s223
        // Predicated region
        $region37: #{tpu_custom_call.1} parent=35 // pred_check
          %p225 = pneg %p44
        $region38: #{tpu_custom_call.1} parent=35 // pred_check_branch
          %227 = sbr.rel (%p225) target = $region40
        $region39: #{tpu_custom_call.1} parent=35 // pred_region
          %228 = dma.done %s221, 2048
        $region40: #{tpu_custom_call.1} parent=35 // pred_fallthru
          _
        // Predicated region
        $region41: #{tpu_custom_call.1} parent=35 // pred_check
          %p229 = pneg %p65
        $region42: #{tpu_custom_call.1} parent=35 // pred_check_branch
          %231 = sbr.rel (%p229) target = $region44
        $region43: #{tpu_custom_call.1} parent=35 // pred_region
          %232 = dma.done [#allocation6], 2048
        $region44: #{tpu_custom_call.1} parent=35 // pred_fallthru
          _
        // Predicated region
        $region45: #{tpu_custom_call.1} parent=35 // pred_check
          %p233 = pneg %p86
        $region46: #{tpu_custom_call.1} parent=35 // pred_check_branch
          %235 = sbr.rel (%p233) target = $region48
        $region47: #{tpu_custom_call.1} parent=35 // pred_region
          %236 = dma.done [#allocation6], 1024
        $region48: #{tpu_custom_call.1} parent=35 // pred_fallthru
          _
        // Predicated region
        $region49: #{tpu_custom_call.1} parent=35 // pred_check
          %p237 = pneg %p107
        $region50: #{tpu_custom_call.1} parent=35 // pred_check_branch
          %239 = sbr.rel (%p237) target = $region52
        $region51: #{tpu_custom_call.1} parent=35 // pred_region
          %240 = dma.done [#allocation9], 256
        $region52: #{tpu_custom_call.1} parent=35 // pred_fallthru
          _
        %s241 = sand.u32 %s31, 1
        %s242 = scalar_lea.sflag [#allocation3], %s241
        %s243 = sand.u32 %s31, 1
        %s244 = smul.addr %s243, 128
        %s245 = scalar_lea.vmem [#allocation2], %s244
        %p246 = pneg %p44
        %p247 = pneg %p41
        %p248 = pneg %p65
        %p249 = pneg %p62
        %p250 = pneg %p86
        %p251 = pneg %p83
        %p252 = pneg %p107
        %p253 = pneg %p104
        %p254 = pneg %p133
        %p255 = pneg %p130
        %s256 = sand.u32 %s120, 1
        %s257 = scalar_lea.sflag [#allocation4], %s256
        %s258 = sand.u32 %s120, 1
        %s259 = smul.addr %s258, 8
        %s260 = scalar_lea.vmem [#allocation10], %s259
        %s261 = smul.u32 8, %s23
        %v263 = vld [vmem:[%s224] sm:$0xff]
        %v264 = vld [vmem:[%s224 + $0x8] sm:$0xff]
        %v265 = vld [vmem:[%s224 + $0x10] sm:$0xff]
        %v266 = vld [vmem:[%s224 + $0x18] sm:$0xff]
        %v267 = vld [vmem:[%s224 + $0x20] sm:$0xff]
        %v268 = vld [vmem:[%s224 + $0x28] sm:$0xff]
        %v269 = vld [vmem:[%s224 + $0x30] sm:$0xff]
        %v270 = vld [vmem:[%s224 + $0x38] sm:$0xff]
        %v271 = vld [vmem:[%s224 + $0x40] sm:$0xff]
        %v272 = vld [vmem:[%s224 + $0x48] sm:$0xff]
        %v273 = vld [vmem:[%s224 + $0x50] sm:$0xff]
        %v274 = vld [vmem:[%s224 + $0x58] sm:$0xff]
        %v275 = vld [vmem:[%s224 + $0x60] sm:$0xff]
        %v276 = vld [vmem:[%s224 + $0x68] sm:$0xff]
        %v277 = vld [vmem:[%s224 + $0x70] sm:$0xff]
        %v278 = vld [vmem:[%s224 + $0x78] sm:$0xff]
        %v279 = vld [vmem:[#allocation5] sm:$0xf]
        %v280 = vld [vmem:[#allocation5 + $0x4] sm:$0xf]
        %v281 = vld [vmem:[#allocation5 + $0x8] sm:$0xf]
        %v282 = vld [vmem:[#allocation5 + $0xc] sm:$0xf]
        %v283 = vld [vmem:[#allocation5 + $0x10] sm:$0xf]
        %v284 = vld [vmem:[#allocation5 + $0x14] sm:$0xf]
        %v285 = vld [vmem:[#allocation5 + $0x18] sm:$0xf]
        %v286 = vld [vmem:[#allocation5 + $0x1c] sm:$0xf]
        %v287 = vld [vmem:[#allocation5 + $0x20] sm:$0xf]
        %v288 = vld [vmem:[#allocation5 + $0x24] sm:$0xf]
        %v289 = vld [vmem:[#allocation5 + $0x28] sm:$0xf]
        %v290 = vld [vmem:[#allocation5 + $0x2c] sm:$0xf]
        %v291 = vld [vmem:[#allocation5 + $0x30] sm:$0xf]
        %v292 = vld [vmem:[#allocation5 + $0x34] sm:$0xf]
        %v293 = vld [vmem:[#allocation5 + $0x38] sm:$0xf]
        %v294 = vld [vmem:[#allocation5 + $0x3c] sm:$0xf]
        %v295 = vld [vmem:[#allocation5 + $0x40] sm:$0xf]
        %v296 = vld [vmem:[#allocation5 + $0x44] sm:$0xf]
        %v297 = vld [vmem:[#allocation5 + $0x48] sm:$0xf]
        %v298 = vld [vmem:[#allocation5 + $0x4c] sm:$0xf]
        %v299 = vld [vmem:[#allocation5 + $0x50] sm:$0xf]
        %v300 = vld [vmem:[#allocation5 + $0x54] sm:$0xf]
        %v301 = vld [vmem:[#allocation5 + $0x58] sm:$0xf]
        %v302 = vld [vmem:[#allocation5 + $0x5c] sm:$0xf]
        %v303 = vld [vmem:[#allocation5 + $0x60] sm:$0xf]
        %v304 = vld [vmem:[#allocation5 + $0x64] sm:$0xf]
        %v305 = vld [vmem:[#allocation5 + $0x68] sm:$0xf]
        %v306 = vld [vmem:[#allocation5 + $0x6c] sm:$0xf]
        %v307 = vld [vmem:[#allocation5 + $0x70] sm:$0xf]
        %v308 = vld [vmem:[#allocation5 + $0x74] sm:$0xf]
        %v309 = vld [vmem:[#allocation5 + $0x78] sm:$0xf]
        %v310 = vld [vmem:[#allocation5 + $0x7c] sm:$0xf]
        %v327 = vunpack.c.l.b16 %v263
        %v328 = vunpack.c.h.b16 %v263
        %v329 = vunpack.c.l.b16 %v264
        %v330 = vunpack.c.h.b16 %v264
        %v331 = vunpack.c.l.b16 %v265
        %v332 = vunpack.c.h.b16 %v265
        %v333 = vunpack.c.l.b16 %v266
        %v334 = vunpack.c.h.b16 %v266
        %v335 = vunpack.c.l.b16 %v267
        %v336 = vunpack.c.h.b16 %v267
        %v337 = vunpack.c.l.b16 %v268
        %v338 = vunpack.c.h.b16 %v268
        %v339 = vunpack.c.l.b16 %v269
        %v340 = vunpack.c.h.b16 %v269
        %v341 = vunpack.c.l.b16 %v270
        %v342 = vunpack.c.h.b16 %v270
        %v343 = vunpack.c.l.b16 %v271
        %v344 = vunpack.c.h.b16 %v271
        %v345 = vunpack.c.l.b16 %v272
        %v346 = vunpack.c.h.b16 %v272
        %v347 = vunpack.c.l.b16 %v273
        %v348 = vunpack.c.h.b16 %v273
        %v349 = vunpack.c.l.b16 %v274
        %v350 = vunpack.c.h.b16 %v274
        %v351 = vunpack.c.l.b16 %v275
        %v352 = vunpack.c.h.b16 %v275
        %v353 = vunpack.c.l.b16 %v276
        %v354 = vunpack.c.h.b16 %v276
        %v355 = vunpack.c.l.b16 %v277
        %v356 = vunpack.c.h.b16 %v277
        %v357 = vunpack.c.l.b16 %v278
        %v358 = vunpack.c.h.b16 %v278
        %v359 = vpack.c.b16 %v329, %v327
        %v360 = vpack.c.b16 %v330, %v328
        %v361 = vpack.c.b16 %v333, %v331
        %v362 = vpack.c.b16 %v334, %v332
        %v363 = vpack.c.b16 %v337, %v335
        %v364 = vpack.c.b16 %v338, %v336
        %v365 = vpack.c.b16 %v341, %v339
        %v366 = vpack.c.b16 %v342, %v340
        %v367 = vpack.c.b16 %v345, %v343
        %v368 = vpack.c.b16 %v346, %v344
        %v369 = vpack.c.b16 %v349, %v347
        %v370 = vpack.c.b16 %v350, %v348
        %v371 = vpack.c.b16 %v353, %v351
        %v372 = vpack.c.b16 %v354, %v352
        %v373 = vpack.c.b16 %v357, %v355
        %v374 = vpack.c.b16 %v358, %v356
        %v423 = vunpack.c.l.b16 %v279
        %v424 = vunpack.c.l.b16 %v280
        %v425 = vunpack.c.l.b16 %v281
        %v426 = vunpack.c.l.b16 %v282
        %v427 = vunpack.c.l.b16 %v283
        %v428 = vunpack.c.l.b16 %v284
        %v429 = vunpack.c.l.b16 %v285
        %v430 = vunpack.c.l.b16 %v286
        %v431 = vunpack.c.l.b16 %v287
        %v432 = vunpack.c.l.b16 %v288
        %v433 = vunpack.c.l.b16 %v289
        %v434 = vunpack.c.l.b16 %v290
        %v435 = vunpack.c.l.b16 %v291
        %v436 = vunpack.c.l.b16 %v292
        %v437 = vunpack.c.l.b16 %v293
        %v438 = vunpack.c.l.b16 %v294
        %v439 = vunpack.c.l.b16 %v295
        %v440 = vunpack.c.l.b16 %v296
        %v441 = vunpack.c.l.b16 %v297
        %v442 = vunpack.c.l.b16 %v298
        %v443 = vunpack.c.l.b16 %v299
        %v444 = vunpack.c.l.b16 %v300
        %v445 = vunpack.c.l.b16 %v301
        %v446 = vunpack.c.l.b16 %v302
        %v447 = vunpack.c.l.b16 %v303
        %v448 = vunpack.c.l.b16 %v304
        %v449 = vunpack.c.l.b16 %v305
        %v450 = vunpack.c.l.b16 %v306
        %v451 = vunpack.c.l.b16 %v307
        %v452 = vunpack.c.l.b16 %v308
        %v453 = vunpack.c.l.b16 %v309
        %v454 = vunpack.c.l.b16 %v310
        %v455 = vpack.c.b16 %v424, %v423
        %v456 = vpack.c.b16 %v426, %v425
        %v457 = vpack.c.b16 %v428, %v427
        %v458 = vpack.c.b16 %v430, %v429
        %v459 = vpack.c.b16 %v432, %v431
        %v460 = vpack.c.b16 %v434, %v433
        %v461 = vpack.c.b16 %v436, %v435
        %v462 = vpack.c.b16 %v438, %v437
        %v463 = vpack.c.b16 %v440, %v439
        %v464 = vpack.c.b16 %v442, %v441
        %v465 = vpack.c.b16 %v444, %v443
        %v466 = vpack.c.b16 %v446, %v445
        %v467 = vpack.c.b16 %v448, %v447
        %v468 = vpack.c.b16 %v450, %v449
        %v469 = vpack.c.b16 %v452, %v451
        %v470 = vpack.c.b16 %v454, %v453
        %487 = vmatprep.subr.bf16.mxu0 0
        %488 = vmatpush1.bf16.msra.mxu0 %v455
        %489 = vmatprep.subr.bf16.mxu0 0
        %490 = vmatpush1.bf16.msra.mxu0 %v456
        %491 = vmatprep.subr.bf16.mxu0 0
        %492 = vmatpush1.bf16.msra.mxu0 %v457
        %493 = vmatprep.subr.bf16.mxu0 0
        %494 = vmatpush1.bf16.msra.mxu0 %v458
        %495 = vmatprep.subr.bf16.mxu0 0
        %496 = vmatpush1.bf16.msra.mxu0 %v459
        %497 = vmatprep.subr.bf16.mxu0 0
        %498 = vmatpush1.bf16.msra.mxu0 %v460
        %499 = vmatprep.subr.bf16.mxu0 0
        %500 = vmatpush1.bf16.msra.mxu0 %v461
        %501 = vmatprep.subr.bf16.mxu0 0
        %502 = vmatpush1.bf16.msra.mxu0 %v462
        %503 = vmatprep.subr.bf16.mxu0 0
        %504 = vmatpush1.bf16.msra.mxu0 %v463
        %505 = vmatprep.subr.bf16.mxu0 0
        %506 = vmatpush1.bf16.msra.mxu0 %v464
        %507 = vmatprep.subr.bf16.mxu0 0
        %508 = vmatpush1.bf16.msra.mxu0 %v465
        %509 = vmatprep.subr.bf16.mxu0 0
        %510 = vmatpush1.bf16.msra.mxu0 %v466
        %511 = vmatprep.subr.bf16.mxu0 0
        %512 = vmatpush1.bf16.msra.mxu0 %v467
        %513 = vmatprep.subr.bf16.mxu0 0
        %514 = vmatpush1.bf16.msra.mxu0 %v468
        %515 = vmatprep.subr.bf16.mxu0 0
        %516 = vmatpush1.bf16.msra.mxu0 %v469
        %517 = vmatprep.subr.bf16.mxu0 0
        %518 = vmatpush1.bf16.msra.mxu0 %v470
        %519 = vmatprep.mubr.bf16.mxu0 %v360
        %520 = vmatmul.mubr.bf16.gmra.mrb[0].mxu0 %v359
        %v521 = vpop.f32.mrb[0].mxu0
        %v522 = vadd.f32 0.0, %v521
        %v523 = vpop.f32.mrb[0].mxu0
        %v524 = vpop.f32.mrb[0].mxu0
        %v525 = vadd.f32 0.0, %v524
        %v526 = vpop.f32.mrb[0].mxu0
        %527 = vmatprep.mubr.bf16.mxu0 %v362
        %528 = vmatmul.mubr.bf16.gmra.mrb[0].mxu0 %v361
        %v529 = vpop.f32.mrb[0].mxu0
        %v530 = vadd.f32 0.0, %v529
        %v531 = vpop.f32.mrb[0].mxu0
        %v532 = vpop.f32.mrb[0].mxu0
        %v533 = vadd.f32 0.0, %v532
        %v534 = vpop.f32.mrb[0].mxu0
        %535 = vmatprep.mubr.bf16.mxu0 %v364
        %536 = vmatmul.mubr.bf16.gmra.mrb[0].mxu0 %v363
        %v537 = vpop.f32.mrb[0].mxu0
        %v538 = vadd.f32 0.0, %v537
        %v539 = vpop.f32.mrb[0].mxu0
        %v540 = vpop.f32.mrb[0].mxu0
        %v541 = vadd.f32 0.0, %v540
        %v542 = vpop.f32.mrb[0].mxu0
        %543 = vmatprep.mubr.bf16.mxu0 %v366
        %544 = vmatmul.mubr.bf16.gmra.mrb[0].mxu0 %v365
        %v545 = vpop.f32.mrb[0].mxu0
        %v546 = vadd.f32 0.0, %v545
        %v547 = vpop.f32.mrb[0].mxu0
        %v548 = vpop.f32.mrb[0].mxu0
        %v549 = vadd.f32 0.0, %v548
        %v550 = vpop.f32.mrb[0].mxu0
        %551 = vmatprep.mubr.bf16.mxu0 %v368
        %552 = vmatmul.mubr.bf16.gmra.mrb[0].mxu0 %v367
        %v553 = vpop.f32.mrb[0].mxu0
        %v554 = vadd.f32 0.0, %v553
        %v555 = vpop.f32.mrb[0].mxu0
        %v556 = vpop.f32.mrb[0].mxu0
        %v557 = vadd.f32 0.0, %v556
        %v558 = vpop.f32.mrb[0].mxu0
        %559 = vmatprep.mubr.bf16.mxu0 %v370
        %560 = vmatmul.mubr.bf16.gmra.mrb[0].mxu0 %v369
        %v561 = vpop.f32.mrb[0].mxu0
        %v562 = vadd.f32 0.0, %v561
        %v563 = vpop.f32.mrb[0].mxu0
        %v564 = vpop.f32.mrb[0].mxu0
        %v565 = vadd.f32 0.0, %v564
        %v566 = vpop.f32.mrb[0].mxu0
        %567 = vmatprep.mubr.bf16.mxu0 %v372
        %568 = vmatmul.mubr.bf16.gmra.mrb[0].mxu0 %v371
        %v569 = vpop.f32.mrb[0].mxu0
        %v570 = vadd.f32 0.0, %v569
        %v571 = vpop.f32.mrb[0].mxu0
        %v572 = vpop.f32.mrb[0].mxu0
        %v573 = vadd.f32 0.0, %v572
        %v574 = vpop.f32.mrb[0].mxu0
        %575 = vmatprep.mubr.bf16.mxu0 %v374
        %576 = vmatmul.mubr.bf16.gmra.mrb[0].mxu0 %v373
        %v577 = vpop.f32.mrb[0].mxu0
        %v578 = vadd.f32 0.0, %v577
        %v579 = vpop.f32.mrb[0].mxu0
        %v580 = vpop.f32.mrb[0].mxu0
        %v581 = vadd.f32 0.0, %v580
        %v582 = vpop.f32.mrb[0].mxu0
        %583 = vdwg.mxu0
        %v584 = vmax.f32 %v522, 0.0
        %v585 = vmax.f32 %v525, 0.0
        %v586 = vmax.f32 %v530, 0.0
        %v587 = vmax.f32 %v533, 0.0
        %v588 = vmax.f32 %v538, 0.0
        %v589 = vmax.f32 %v541, 0.0
        %v590 = vmax.f32 %v546, 0.0
        %v591 = vmax.f32 %v549, 0.0
        %v592 = vmax.f32 %v554, 0.0
        %v593 = vmax.f32 %v557, 0.0
        %v594 = vmax.f32 %v562, 0.0
        %v595 = vmax.f32 %v565, 0.0
        %v596 = vmax.f32 %v570, 0.0
        %v597 = vmax.f32 %v573, 0.0
        %v598 = vmax.f32 %v578, 0.0
        %v599 = vmax.f32 %v581, 0.0
        %v600 = vld [vmem:[#allocation8] sm:$0xff]
        %v601 = vld [vmem:[#allocation8 + $0x8] sm:$0xff]
        %v602 = vmul.f32 %v584, %v600
        %v603 = vmul.f32 %v585, %v601
        %v604 = vmul.f32 %v586, %v600
        %v605 = vmul.f32 %v587, %v601
        %v606 = vmul.f32 %v588, %v600
        %v607 = vmul.f32 %v589, %v601
        %v608 = vmul.f32 %v590, %v600
        %v609 = vmul.f32 %v591, %v601
        %v610 = vmul.f32 %v592, %v600
        %v611 = vmul.f32 %v593, %v601
        %v612 = vmul.f32 %v594, %v600
        %v613 = vmul.f32 %v595, %v601
        %v614 = vmul.f32 %v596, %v600
        %v615 = vmul.f32 %v597, %v601
        %v616 = vmul.f32 %v598, %v600
        %v617 = vmul.f32 %v599, %v601
        %v618 = vmax.f32 %v602, %v603
        %v619 = vrot.slane %v618, 4
        %v620 = vmax.f32 %v618, %v619
        %v621 = vrot.slane %v620, 2
        %v622 = vmax.f32 %v620, %v621
        %v623 = vrot.slane %v622, 1
        %v624 = vmax.f32 %v622, %v623
        %v625 = vmax.f32 %v604, %v605
        %v626 = vrot.slane %v625, 4
        %v627 = vmax.f32 %v625, %v626
        %v628 = vrot.slane %v627, 2
        %v629 = vmax.f32 %v627, %v628
        %v630 = vrot.slane %v629, 1
        %v631 = vmax.f32 %v629, %v630
        %v632 = vmax.f32 %v606, %v607
        %v633 = vrot.slane %v632, 4
        %v634 = vmax.f32 %v632, %v633
        %v635 = vrot.slane %v634, 2
        %v636 = vmax.f32 %v634, %v635
        %v637 = vrot.slane %v636, 1
        %v638 = vmax.f32 %v636, %v637
        %v639 = vmax.f32 %v608, %v609
        %v640 = vrot.slane %v639, 4
        %v641 = vmax.f32 %v639, %v640
        %v642 = vrot.slane %v641, 2
        %v643 = vmax.f32 %v641, %v642
        %v644 = vrot.slane %v643, 1
        %v645 = vmax.f32 %v643, %v644
        %v646 = vmax.f32 %v610, %v611
        %v647 = vrot.slane %v646, 4
        %v648 = vmax.f32 %v646, %v647
        %v649 = vrot.slane %v648, 2
        %v650 = vmax.f32 %v648, %v649
        %v651 = vrot.slane %v650, 1
        %v652 = vmax.f32 %v650, %v651
        %v653 = vmax.f32 %v612, %v613
        %v654 = vrot.slane %v653, 4
        %v655 = vmax.f32 %v653, %v654
        %v656 = vrot.slane %v655, 2
        %v657 = vmax.f32 %v655, %v656
        %v658 = vrot.slane %v657, 1
        %v659 = vmax.f32 %v657, %v658
        %v660 = vmax.f32 %v614, %v615
        %v661 = vrot.slane %v660, 4
        %v662 = vmax.f32 %v660, %v661
        %v663 = vrot.slane %v662, 2
        %v664 = vmax.f32 %v662, %v663
        %v665 = vrot.slane %v664, 1
        %v666 = vmax.f32 %v664, %v665
        %v667 = vmax.f32 %v616, %v617
        %v668 = vrot.slane %v667, 4
        %v669 = vmax.f32 %v667, %v668
        %v670 = vrot.slane %v669, 2
        %v671 = vmax.f32 %v669, %v670
        %v672 = vrot.slane %v671, 1
        %v673 = vmax.f32 %v671, %v672
        %v674 = vpack.c.bf16 %v624, %v624
        %v675 = vpack.c.bf16 %v631, %v631
        %v676 = vpack.c.bf16 %v638, %v638
        %v677 = vpack.c.bf16 %v645, %v645
        %v678 = vpack.c.bf16 %v652, %v652
        %v679 = vpack.c.bf16 %v659, %v659
        %v680 = vpack.c.bf16 %v666, %v666
        %v681 = vpack.c.bf16 %v673, %v673
        %v682 = vld [vmem:[#allocation7] sm:$0xf]
        %v683 = vld [vmem:[#allocation7 + $0x4] sm:$0xf]
        %v684 = vld [vmem:[#allocation7 + $0x8] sm:$0xf]
        %v685 = vld [vmem:[#allocation7 + $0xc] sm:$0xf]
        %v686 = vld [vmem:[#allocation7 + $0x10] sm:$0xf]
        %v687 = vld [vmem:[#allocation7 + $0x14] sm:$0xf]
        %v688 = vld [vmem:[#allocation7 + $0x18] sm:$0xf]
        %v689 = vld [vmem:[#allocation7 + $0x1c] sm:$0xf]
        %v690 = vld [vmem:[#allocation7 + $0x20] sm:$0xf]
        %v691 = vld [vmem:[#allocation7 + $0x24] sm:$0xf]
        %v692 = vld [vmem:[#allocation7 + $0x28] sm:$0xf]
        %v693 = vld [vmem:[#allocation7 + $0x2c] sm:$0xf]
        %v694 = vld [vmem:[#allocation7 + $0x30] sm:$0xf]
        %v695 = vld [vmem:[#allocation7 + $0x34] sm:$0xf]
        %v696 = vld [vmem:[#allocation7 + $0x38] sm:$0xf]
        %v697 = vld [vmem:[#allocation7 + $0x3c] sm:$0xf]
        %v706 = vunpack.c.l.b16 %v674
        %v707 = vunpack.c.l.b16 %v675
        %v708 = vunpack.c.l.b16 %v676
        %v709 = vunpack.c.l.b16 %v677
        %v710 = vunpack.c.l.b16 %v678
        %v711 = vunpack.c.l.b16 %v679
        %v712 = vunpack.c.l.b16 %v680
        %v713 = vunpack.c.l.b16 %v681
        %vm714 = vcmask 1041409
        %v715 = vsel %vm714, %v707, %v706
        %vm716 = vcmask 1042434
        %v717 = vsel %vm716, %v708, %v715
        %vm718 = vcmask 1043459
        %v719 = vsel %vm718, %v709, %v717
        %vm720 = vcmask 1044484
        %v721 = vsel %vm720, %v710, %v719
        %vm722 = vcmask 1045509
        %v723 = vsel %vm722, %v711, %v721
        %vm724 = vcmask 1046534
        %v725 = vsel %vm724, %v712, %v723
        %vm726 = vcmask 1047559
        %v727 = vsel %vm726, %v713, %v725
        %v728 = vpack.c.b16 %v727, %v727
        %v746 = vunpack.c.l.b16 %v682
        %v747 = vunpack.c.l.b16 %v683
        %v748 = vunpack.c.l.b16 %v684
        %v749 = vunpack.c.l.b16 %v685
        %v750 = vunpack.c.l.b16 %v686
        %v751 = vunpack.c.l.b16 %v687
        %v752 = vunpack.c.l.b16 %v688
        %v753 = vunpack.c.l.b16 %v689
        %v754 = vunpack.c.l.b16 %v690
        %v755 = vunpack.c.l.b16 %v691
        %v756 = vunpack.c.l.b16 %v692
        %v757 = vunpack.c.l.b16 %v693
        %v758 = vunpack.c.l.b16 %v694
        %v759 = vunpack.c.l.b16 %v695
        %v760 = vunpack.c.l.b16 %v696
        %v761 = vunpack.c.l.b16 %v697
        %v762 = vpack.c.b16 %v747, %v746
        %v763 = vpack.c.b16 %v749, %v748
        %v764 = vpack.c.b16 %v751, %v750
        %v765 = vpack.c.b16 %v753, %v752
        %v766 = vpack.c.b16 %v755, %v754
        %v767 = vpack.c.b16 %v757, %v756
        %v768 = vpack.c.b16 %v759, %v758
        %v769 = vpack.c.b16 %v761, %v760
        %778 = vmatprep.subr.bf16.mxu0 0
        %779 = vmatpush1.bf16.msra.mxu0 %v762
        %780 = vmatprep.subr.bf16.mxu0 0
        %781 = vmatpush1.bf16.msra.mxu0 %v763
        %782 = vmatprep.subr.bf16.mxu0 0
        %783 = vmatpush1.bf16.msra.mxu0 %v764
        %784 = vmatprep.subr.bf16.mxu0 0
        %785 = vmatpush1.bf16.msra.mxu0 %v765
        %786 = vmatprep.subr.bf16.mxu0 0
        %787 = vmatpush1.bf16.msra.mxu0 %v766
        %788 = vmatprep.subr.bf16.mxu0 0
        %789 = vmatpush1.bf16.msra.mxu0 %v767
        %790 = vmatprep.subr.bf16.mxu0 0
        %791 = vmatpush1.bf16.msra.mxu0 %v768
        %792 = vmatprep.subr.bf16.mxu0 0
        %793 = vmatpush1.bf16.msra.mxu0 %v769
        %794 = vmatprep.subr.bf16.mxu0 0
        %795 = vmatpush1.bf16.msra.mxu0 0
        %796 = vmatprep.subr.bf16.mxu0 0
        %797 = vmatpush1.bf16.msra.mxu0 0
        %798 = vmatprep.subr.bf16.mxu0 0
        %799 = vmatpush1.bf16.msra.mxu0 0
        %800 = vmatprep.subr.bf16.mxu0 0
        %801 = vmatpush1.bf16.msra.mxu0 0
        %802 = vmatprep.subr.bf16.mxu0 0
        %803 = vmatpush1.bf16.msra.mxu0 0
        %804 = vmatprep.subr.bf16.mxu0 0
        %805 = vmatpush1.bf16.msra.mxu0 0
        %806 = vmatprep.subr.bf16.mxu0 0
        %807 = vmatpush1.bf16.msra.mxu0 0
        %808 = vmatprep.subr.bf16.mxu0 0
        %809 = vmatpush1.bf16.msra.mxu0 0
        %810 = vmatprep.mubr.bf16.mxu0 0
        %811 = vmatmul.mubr.bf16.gmra.mrb[0].mxu0 %v728
        %v812 = vpop.f32.mrb[0].mxu0
        %v813 = vadd.f32 0.0, %v812
        %v814 = vpop.f32.mrb[0].mxu0
        %v815 = vpop.f32.mrb[0].mxu0
        %v816 = vpop.f32.mrb[0].mxu0
        %817 = vdwg.mxu0
        %818 = vst [vmem:[%s260] sm:$0xff] %v813
        %s819 = sand.u32 %s120, 1
        %s820 = scalar_lea.sflag [#allocation4], %s819
        %s821 = sand.u32 %s120, 1
        %s822 = smul.addr %s821, 8
        %s823 = scalar_lea.vmem [#allocation10], %s822
        // Predicated region
        $region53: #{tpu_custom_call.1} parent=35 // pred_check
          %p824 = pneg %p130
        $region54: #{tpu_custom_call.1} parent=35 // pred_check_branch
          %826 = sbr.rel (%p824) target = $region56
        $region55: #{tpu_custom_call.1} parent=35 // pred_region
          %s828 = ssub.s32 128, 128
          %829 = vsyncadd %s820, %s828
          %s830 = smul.addr %s23, 128
          %s831 = scalar_lea.hbm %s4, %s830
          %s833 = sshll.u32 %s823, 4
          %s834 = int_to_ptr.vmem [resolvable:$true] %s833
          %836 = dma.vmem_to_hbm [thread:$0]  %s834, 128, %s831, %s820
        $region56: #{tpu_custom_call.1} parent=35 // pred_fallthru
          _
      $region36: #{tpu_custom_call.1} parent=5 // pred_fallthru
        _
      %p837 = scmp.le.s32.totalorder 2, %s18
      // Predicated region
      $region57: #{tpu_custom_call.1} parent=5 // pred_check
        %p838 = pneg %p837
      $region58: #{tpu_custom_call.1} parent=5 // pred_check_branch
        %840 = sbr.rel (%p838) target = $region60
      $region59: #{tpu_custom_call.1} parent=5 // pred_region
        %s841 = ssub.s32 %s18, 2
        // Predicated region
        $region61: #{tpu_custom_call.1} parent=59 // pred_check
          %p842 = pneg %p136
        $region62: #{tpu_custom_call.1} parent=59 // pred_check_branch
          %844 = sbr.rel (%p842) target = $region64
        $region63: #{tpu_custom_call.1} parent=59 // pred_region
          %s845 = sand.u32 %s121, 1
          %s846 = scalar_lea.sflag [#allocation4], %s845
          %s847 = sand.u32 %s121, 1
          %s848 = smul.addr %s847, 8
          %s849 = scalar_lea.vmem [#allocation10], %s848
          %850 = dma.done %s846, 128
        $region64: #{tpu_custom_call.1} parent=59 // pred_fallthru
          _
      $region60: #{tpu_custom_call.1} parent=5 // pred_fallthru
        _
    $region6: #{tpu_custom_call.1} parent=1 // loop_footer
      %s22 = sadd.s32 1, %s18
    $region7: #{tpu_custom_call.1} parent=1 // loop_footer_branch
      %17 = sbr.rel target = $region3
    $region8: #{tpu_custom_call.1} parent=1 // loop_exit
      _
    %851 = vsyncpa [#allocation3], 1
    %s852 = scalar_lea.sflag [#allocation3], 1
    %853 = vsyncpa %s852, 1
    %854 = vsyncpa [#allocation6], 1
    %855 = vsyncpa [#allocation9], 1
    %856 = vsyncpa [#allocation4], 1
    %s857 = scalar_lea.sflag [#allocation4], 1
    %858 = vsyncpa %s857, 1

</llo_original>
